<compile_context>
chip_gen: v7x
topology: tpu7x:2x2x1
jax: 0.10.0
libtpu: 0.0.40
codegen_flags: <defaults>
</compile_context>

<pallas_src>
import math
import functools

import jax
import jax.numpy as jnp
from jax import lax
from jax.experimental import pallas as pl
from jax.experimental.pallas import tpu as pltpu

LOG_SQRT_2PI = 0.5 * math.log(2.0 * math.pi)
VMEM_LIMIT_BYTES = 48 * 1024 * 1024  # above 16/32 MiB scoped defaults, below v7x 64 MiB physical


def _softplus(x):
    # numerically stable softplus == log1p(exp(x))  (matches torch.log1p(torch.exp(rho)))
    return jnp.maximum(x, 0.0) + jnp.log1p(jnp.exp(-jnp.abs(x)))


def _normal_logpdf(x, mu, sigma):
    z = (x - mu) / sigma
    return -0.5 * z * z - jnp.log(sigma) - LOG_SQRT_2PI


def make_prior_logpdf(prior_type, prior_sigma=None, prior_pi=None,
                      prior_sigma_1=None, prior_sigma_2=None):
    """Elementwise prior log-pdf with all constants folded at trace time
    (multiply by 1/sigma instead of dividing; hoisted log terms; stable logaddexp)."""
    if prior_type == "normal":
        inv_s = 1.0 / float(prior_sigma)
        const = -math.log(float(prior_sigma)) - LOG_SQRT_2PI

        def f(x):
            z = x * inv_s
            return -0.5 * z * z + const
        return f
    elif prior_type == "mixture":
        pi = float(prior_pi)
        s1 = float(prior_sigma_1)
        s2 = float(prior_sigma_2)
        inv_s1, inv_s2 = 1.0 / s1, 1.0 / s2
        c1 = math.log(pi) - math.log(s1) - LOG_SQRT_2PI
        c2 = math.log(1.0 - pi) - math.log(s2) - LOG_SQRT_2PI

        def f(x):
            z1 = x * inv_s1
            z2 = x * inv_s2
            lp1 = -0.5 * z1 * z1 + c1
            lp2 = -0.5 * z2 * z2 + c2
            hi = jnp.maximum(lp1, lp2)
            # stable logaddexp: only 2 EUP pushes/elem (exp, log1p)
            return hi + jnp.log1p(jnp.exp(-jnp.abs(lp1 - lp2)))
        return f
    raise ValueError(f"unknown prior_type {prior_type}")


def _choose_block(dim, target, align=128):
    """Return (block, padded_dim) with padded_dim % block == 0 and block capped at `target`.
    Dims <= target use the full extent (always a legal block, no padding)."""
    if dim <= target:
        return dim, dim
    t = max(align, (target // align) * align)
    # 1) exact aligned divisor of dim (no padding)
    b = t
    while b >= align:
        if dim % b == 0:
            return b, dim
        b -= align
    # 2) pad dim up to a multiple of `align`, then use an aligned divisor of the padded dim
    pdim = ((dim + align - 1) // align) * align
    b = t
    while b >= align:
        if pdim % b == 0:
            return b, pdim
        b -= align
    return align, pdim  # pdim % align == 0, so this always works


# --------------------------- fused Pallas kernel ----------------------------

def fused_bayes_linear_kernel(x_ref, mu_ref, rho_ref, eps_ref,
                              mub_ref, rhob_ref, epsb_ref,
                              y_ref, logq_ref, logp_ref, acc_ref,
                              *, prior_logpdf):
    k = pl.program_id(1)              # dim_in (reduction) tile -- last grid axis
    nk = pl.num_programs(1)

    # logq/logp blocks are per-j partials (block index depends only on j), so they are
    # accumulators over k only -> safe to mark the j axis "parallel" (v7x megacore).
    @pl.when(k == 0)
    def _():
        acc_ref[...] = jnp.zeros_like(acc_ref)
        logq_ref[...] = jnp.zeros_like(logq_ref)
        logp_ref[...] = jnp.zeros_like(logp_ref)

    mu = mu_ref[...].astype(jnp.float32)     # no-op for f32 params, upcast for bf16 params
    rho = rho_ref[...].astype(jnp.float32)
    eps = eps_ref[...]
    sigma = _softplus(rho)
    w = mu + sigma * eps                     # rsample(); lives only in VMEM

    # log q(w | mu, sigma):  (w - mu)/sigma == eps  =>  z^2 == eps^2.
    # Single fused reduction (one XLU pass instead of two).
    tile_logq = (jnp.sum(-0.5 * (eps * eps) - jnp.log(sigma))
                 - mu.size * LOG_SQRT_2PI)
    tile_logp = jnp.sum(prior_logpdf(w))
    logq_ref[...] += tile_logq
    logp_ref[...] += tile_logp

    # y_tile += x_tile @ w_tile.T without materializing a transpose:
    # contract dim 1 of x (dim_in) against dim 1 of w (dim_in).
    acc_ref[...] += lax.dot_general(
        x_ref[...], w,
        dimension_numbers=(((1,), (1,)), ((), ())),
        preferred_element_type=jnp.float32)

    @pl.when(k == nk - 1)
    def _():
        mub = mub_ref[...].astype(jnp.float32)
        rhob = rhob_ref[...].astype(jnp.float32)
        epsb = epsb_ref[...]
        sigmab = _softplus(rhob)
        b = mub + sigmab * epsb
        y_ref[...] = (acc_ref[...] + b).astype(y_ref.dtype)
        logq_ref[...] += (jnp.sum(-0.5 * (epsb * epsb) - jnp.log(sigmab))
                          - mub.size * LOG_SQRT_2PI)
        logp_ref[...] += jnp.sum(prior_logpdf(b))


def bayesian_linear_sample_forward(x, mu, rho, eps, mu_b, rho_b, eps_b, prior_logpdf,
                                   *, tn_target=1024, tk_target=1024):
    batch, dim_in = x.shape
    dim_out = mu.shape[0]
    tn, dout_p = _choose_block(dim_out, tn_target)
    tk, din_p = _choose_block(dim_in, tk_target)
    pad_n, pad_k = dout_p - dim_out, din_p - dim_in

    if pad_n or pad_k:
        # Zero-pad (mu=0, rho=0, eps=0) so the padded region samples w=0 with sigma=softplus(0);
        # its analytically-known log-prob contribution is subtracted after the kernel.
        x = jnp.pad(x, ((0, 0), (0, pad_k)))
        mu = jnp.pad(mu, ((0, pad_n), (0, pad_k)))
        rho = jnp.pad(rho, ((0, pad_n), (0, pad_k)))
        eps = jnp.pad(eps, ((0, pad_n), (0, pad_k)))
        mu_b = jnp.pad(mu_b, (0, pad_n))
        rho_b = jnp.pad(rho_b, (0, pad_n))
        eps_b = jnp.pad(eps_b, (0, pad_n))

    nj, nk = dout_p // tn, din_p // tk

    kern = functools.partial(fused_bayes_linear_kernel, prior_logpdf=prior_logpdf)
    y, logq_part, logp_part = pl.pallas_call(
        kern,
        out_shape=(jax.ShapeDtypeStruct((batch, dout_p), x.dtype),
                   jax.ShapeDtypeStruct((nj, 8, 128), jnp.float32),   # per-j logq partials
                   jax.ShapeDtypeStruct((nj, 8, 128), jnp.float32)),  # per-j logp partials
        grid_spec=pltpu.PrefetchScalarGridSpec(
            num_scalar_prefetch=0,
            grid=(nj, nk),
            in_specs=[
                pl.BlockSpec((batch, tk), lambda j, k: (0, k)),   # x
                pl.BlockSpec((tn, tk), lambda j, k: (j, k)),      # mu
                pl.BlockSpec((tn, tk), lambda j, k: (j, k)),      # rho
                pl.BlockSpec((tn, tk), lambda j, k: (j, k)),      # eps
                pl.BlockSpec((1, tn), lambda j, k: (0, j)),       # mu_bias  (row)
                pl.BlockSpec((1, tn), lambda j, k: (0, j)),       # rho_bias (row)
                pl.BlockSpec((1, tn), lambda j, k: (0, j)),       # eps_bias (row)
            ],
            out_specs=(
                pl.BlockSpec((batch, tn), lambda j, k: (0, j)),       # y
                pl.BlockSpec((1, 8, 128), lambda j, k: (j, 0, 0)),    # logq per-j partial
                pl.BlockSpec((1, 8, 128), lambda j, k: (j, 0, 0)),    # logp per-j partial
            ),
            scratch_shapes=[pltpu.VMEM((batch, tn), jnp.float32)]),
        compiler_params=pltpu.CompilerParams(
            # j tiles are independent -> shard across v7x TensorCores; k is the reduction.
            dimension_semantics=("parallel", "arbitrary"),
            vmem_limit_bytes=VMEM_LIMIT_BYTES),
    )(x, mu, rho, eps,
      mu_b.reshape(1, -1), rho_b.reshape(1, -1), eps_b.reshape(1, -1))

    logq = jnp.sum(logq_part[:, 0, 0])
    logp = jnp.sum(logp_part[:, 0, 0])

    if pad_n or pad_k:
        n_pad = dout_p * din_p - dim_out * dim_in + pad_n   # padded weight + bias elements
        sigma0 = _softplus(jnp.float32(0.0))                # padded elems: mu=eps=0, rho=0
        logq = logq - n_pad * (-jnp.log(sigma0) - LOG_SQRT_2PI)
        logp = logp - n_pad * prior_logpdf(jnp.float32(0.0))
        y = y[:, :dim_out]
    return y, logq, logp


# --------------------- plain linear kernel (prior path) ---------------------

def linear_kernel(x_ref, w_ref, b_ref, y_ref, acc_ref):
    k = pl.program_id(1)

    @pl.when(k == 0)
    def _():
        acc_ref[...] = jnp.zeros_like(acc_ref)

    acc_ref[...] += lax.dot_general(
        x_ref[...], w_ref[...],
        dimension_numbers=(((1,), (1,)), ((), ())),
        preferred_element_type=jnp.float32)

    @pl.when(k == pl.num_programs(1) - 1)
    def _():
        y_ref[...] = (acc_ref[...] + b_ref[...]).astype(y_ref.dtype)


def pallas_linear(x, w, b, *, tn_target=1024, tk_target=1024):
    batch, dim_in = x.shape
    dim_out = w.shape[0]
    tn, dout_p = _choose_block(dim_out, tn_target)
    tk, din_p = _choose_block(dim_in, tk_target)
    pad_n, pad_k = dout_p - dim_out, din_p - dim_in
    if pad_n or pad_k:
        x = jnp.pad(x, ((0, 0), (0, pad_k)))
        w = jnp.pad(w, ((0, pad_n), (0, pad_k)))
        b = jnp.pad(b, (0, pad_n))
    y = pl.pallas_call(
        linear_kernel,
        out_shape=jax.ShapeDtypeStruct((batch, dout_p), x.dtype),
        grid_spec=pltpu.PrefetchScalarGridSpec(
            num_scalar_prefetch=0,
            grid=(dout_p // tn, din_p // tk),
            in_specs=[pl.BlockSpec((batch, tk), lambda j, k: (0, k)),
                      pl.BlockSpec((tn, tk), lambda j, k: (j, k)),
                      pl.BlockSpec((1, tn), lambda j, k: (0, j))],
            out_specs=pl.BlockSpec((batch, tn), lambda j, k: (0, j)),
            scratch_shapes=[pltpu.VMEM((batch, tn), jnp.float32)]),
        compiler_params=pltpu.CompilerParams(
            dimension_semantics=("parallel", "arbitrary"),
            vmem_limit_bytes=VMEM_LIMIT_BYTES),
    )(x, w, b.reshape(1, -1))
    return y[:, :dim_out] if pad_n else y


# ----------------------------- module wrapper -------------------------------

class BayesianLinearPallas:
    def __init__(self, dim_in, dim_out, posterior_rho_init, prior_type,
                 prior_sigma=None, prior_pi=None, prior_sigma_1=None,
                 prior_sigma_2=None, *, key, param_dtype=jnp.float32):
        k_mu, k_mub = jax.random.split(key)
        # matches nn.Parameter(torch.Tensor(dim_out, dim_in).normal_(0, 1)) etc.
        # param_dtype=jnp.bfloat16 halves the weight HBM stream (kernel upcasts to f32).
        self.mu = jax.random.normal(k_mu, (dim_out, dim_in), jnp.float32).astype(param_dtype)
        self.rho = jnp.full((dim_out, dim_in), posterior_rho_init, param_dtype)
        self.mu_bias = jax.random.normal(k_mub, (dim_out,), jnp.float32).astype(param_dtype)
        self.rho_bias = jnp.full((dim_out,), posterior_rho_init, param_dtype)
        self.prior_type = prior_type
        self.prior_params = dict(prior_sigma=prior_sigma, prior_pi=prior_pi,
                                 prior_sigma_1=prior_sigma_1, prior_sigma_2=prior_sigma_2)
        self.prior_logpdf = make_prior_logpdf(prior_type, **self.prior_params)
        self.log_variational_posterior = 0.0
        self.log_prior = 0.0

    def _sample_prior(self, key, shape):
        if self.prior_type == "normal":
            return self.prior_params["prior_sigma"] * jax.random.normal(key, shape, jnp.float32)
        k_c, k_n = jax.random.split(key)
        pi = self.prior_params["prior_pi"]
        comp = jax.random.bernoulli(k_c, 1.0 - pi, shape)  # False -> sigma_1, True -> sigma_2
        sig = jnp.where(comp, self.prior_params["prior_sigma_2"], self.prior_params["prior_sigma_1"])
        return sig * jax.random.normal(k_n, shape, jnp.float32)

    def forward(self, x, sample_from_prior, key):
        dim_out, dim_in = self.mu.shape
        if sample_from_prior:
            k_w, k_b = jax.random.split(key)
            w = self._sample_prior(k_w, (dim_out, dim_in))
            b = self._sample_prior(k_b, (dim_out,))
            return pallas_linear(x, w, b)
        k_w, k_b = jax.random.split(key)
        eps = jax.random.normal(k_w, (dim_out, dim_in), jnp.float32)
        eps_b = jax.random.normal(k_b, (dim_out,), jnp.float32)
        y, logq, logp = bayesian_linear_sample_forward(
            x, self.mu, self.rho, eps, self.mu_bias, self.rho_bias, eps_b,
            self.prior_logpdf)
        self.log_variational_posterior = logq
        self.log_prior = logp
        return y


# ----------------------------------- main ------------------------------------

if __name__ == "__main__":
    DIM_IN, DIM_OUT, BATCH = 32, 16, 8
    key = jax.random.PRNGKey(0)
    k_init, k_x, k_fwd, k_prior, k_big, k_rag = jax.random.split(key, 6)

    layer = BayesianLinearPallas(
        DIM_IN, DIM_OUT, posterior_rho_init=-3.0,
        prior_type="normal", prior_sigma=1.0, key=k_init)

    x = jax.random.normal(k_x, (BATCH, DIM_IN), jnp.float32)

    # ---- 1) variational-posterior path (fused sample + log-probs + matmul), f32 ----
    y = layer.forward(x, sample_from_prior=False, key=k_fwd)
    y = jax.block_until_ready(y)
    logq = jax.block_until_ready(layer.log_variational_posterior)
    logp = jax.block_until_ready(layer.log_prior)

    k_w, k_b = jax.random.split(k_fwd)
    eps = jax.random.normal(k_w, (DIM_OUT, DIM_IN), jnp.float32)
    eps_b = jax.random.normal(k_b, (DIM_OUT,), jnp.float32)
    sigma = jnp.log1p(jnp.exp(layer.rho))
    sigma_b = jnp.log1p(jnp.exp(layer.rho_bias))
    w_ref = layer.mu + sigma * eps
    b_ref = layer.mu_bias + sigma_b * eps_b
    y_ref = x @ w_ref.T + b_ref
    logq_ref = (jnp.sum(_normal_logpdf(w_ref, layer.mu, sigma))
                + jnp.sum(_normal_logpdf(b_ref, layer.mu_bias, sigma_b)))
    logp_ref = (jnp.sum(_normal_logpdf(w_ref, 0.0, jnp.float32(1.0)))
                + jnp.sum(_normal_logpdf(b_ref, 0.0, jnp.float32(1.0))))

    assert jnp.allclose(y, y_ref, atol=1e-4, rtol=1e-4)
    assert jnp.allclose(logq, logq_ref, atol=1e-3, rtol=1e-4)
    assert jnp.allclose(logp, logp_ref, atol=1e-3, rtol=1e-4)

    # ---- 2) prior-sampling path (plain matmul kernel) ----
    y_prior = jax.block_until_ready(layer.forward(x, sample_from_prior=True, key=k_prior))
    assert y_prior.shape == (BATCH, DIM_OUT)

    # ---- 3) tiled grid (2x3), parallel-j partials, mixture prior ----
    DIM_IN2, DIM_OUT2, BATCH2 = 384, 256, 8
    ks = jax.random.split(k_big, 5)
    mu2 = jax.random.normal(ks[0], (DIM_OUT2, DIM_IN2), jnp.float32)
    rho2 = jnp.full((DIM_OUT2, DIM_IN2), -2.0, jnp.float32)
    mu_b2 = jax.random.normal(ks[1], (DIM_OUT2,), jnp.float32)
    rho_b2 = jnp.full((DIM_OUT2,), -2.0, jnp.float32)
    eps2 = jax.random.normal(ks[2], (DIM_OUT2, DIM_IN2), jnp.float32)
    eps_b2 = jax.random.normal(ks[3], (DIM_OUT2,), jnp.float32)
    x2 = jax.random.normal(ks[4], (BATCH2, DIM_IN2), jnp.float32)
    mix_logpdf = make_prior_logpdf("mixture", prior_pi=0.5,
                                   prior_sigma_1=1.0, prior_sigma_2=0.1)
    y2, logq2, logp2 = bayesian_linear_sample_forward(
        x2, mu2, rho2, eps2, mu_b2, rho_b2, eps_b2, mix_logpdf,
        tn_target=128, tk_target=128)   # forces a (2, 3) grid
    y2 = jax.block_until_ready(y2)

    sig2 = jnp.log1p(jnp.exp(rho2))
    sig_b2 = jnp.log1p(jnp.exp(rho_b2))
    w2 = mu2 + sig2 * eps2
    b2 = mu_b2 + sig_b2 * eps_b2
    y2_ref = x2 @ w2.T + b2

    def mix_ref(v):
        lp1 = math.log(0.5) + _normal_logpdf(v, 0.0, jnp.float32(1.0))
        lp2 = math.log(0.5) + _normal_logpdf(v, 0.0, jnp.float32(0.1))
        return jnp.logaddexp(lp1, lp2)

    logq2_ref = (jnp.sum(_normal_logpdf(w2, mu2, sig2))
                 + jnp.sum(_normal_logpdf(b2, mu_b2, sig_b2)))
    logp2_ref = jnp.sum(mix_ref(w2)) + jnp.sum(mix_ref(b2))

    assert jnp.allclose(y2, y2_ref, atol=5e-2, rtol=5e-3)
    assert jnp.allclose(logq2, logq2_ref, atol=1.0, rtol=1e-3)
    assert jnp.allclose(logp2, logp2_ref, atol=1.0, rtol=1e-3)

    # ---- 4) bf16 parameter streaming (halved weight bytes), same tiled shapes ----
    mu2b, rho2b = mu2.astype(jnp.bfloat16), rho2.astype(jnp.bfloat16)
    mu_b2b, rho_b2b = mu_b2.astype(jnp.bfloat16), rho_b2.astype(jnp.bfloat16)
    y3, logq3, logp3 = bayesian_linear_sample_forward(
        x2, mu2b, rho2b, eps2, mu_b2b, rho_b2b, eps_b2, mix_logpdf,
        tn_target=128, tk_target=128)
    y3 = jax.block_until_ready(y3)
    sig3 = jnp.log1p(jnp.exp(rho2b.astype(jnp.float32)))
    sig_b3 = jnp.log1p(jnp.exp(rho_b2b.astype(jnp.float32)))
    w3 = mu2b.astype(jnp.float32) + sig3 * eps2
    b3 = mu_b2b.astype(jnp.float32) + sig_b3 * eps_b2
    assert jnp.allclose(y3, x2 @ w3.T + b3, atol=5e-2, rtol=5e-3)
    assert jnp.allclose(logq3, jnp.sum(_normal_logpdf(w3, mu2b.astype(jnp.float32), sig3))
                        + jnp.sum(_normal_logpdf(b3, mu_b2b.astype(jnp.float32), sig_b3)),
                        atol=1.0, rtol=1e-3)
    assert jnp.allclose(logp3, jnp.sum(mix_ref(w3)) + jnp.sum(mix_ref(b3)),
                        atol=1.0, rtol=1e-3)

    # ---- 5) ragged dims (no 128-divisor): capped tiles + wrapper padding + correction ----
    DIM_IN4, DIM_OUT4 = 200, 200
    kr = jax.random.split(k_rag, 5)
    mu4 = jax.random.normal(kr[0], (DIM_OUT4, DIM_IN4), jnp.float32)
    rho4 = jnp.full((DIM_OUT4, DIM_IN4), -2.0, jnp.float32)
    mu_b4 = jax.random.normal(kr[1], (DIM_OUT4,), jnp.float32)
    rho_b4 = jnp.full((DIM_OUT4,), -2.0, jnp.float32)
    eps4 = jax.random.normal(kr[2], (DIM_OUT4, DIM_IN4), jnp.float32)
    eps_b4 = jax.random.normal(kr[3], (DIM_OUT4,), jnp.float32)
    x4 = jax.random.normal(kr[4], (BATCH, DIM_IN4), jnp.float32)
    norm_logpdf = make_prior_logpdf("normal", prior_sigma=1.0)
    y4, logq4, logp4 = bayesian_linear_sample_forward(
        x4, mu4, rho4, eps4, mu_b4, rho_b4, eps_b4, norm_logpdf,
        tn_target=128, tk_target=128)   # 200 > 128 -> padded to 256, tiles of 128
    y4 = jax.block_until_ready(y4)

    sig4 = jnp.log1p(jnp.exp(rho4)); sig_b4 = jnp.log1p(jnp.exp(rho_b4))
    w4 = mu4 + sig4 * eps4; b4 = mu_b4 + sig_b4 * eps_b4
    assert y4.shape == (BATCH, DIM_OUT4)
    assert jnp.allclose(y4, x4 @ w4.T + b4, atol=5e-2, rtol=5e-3)
    assert jnp.allclose(logq4, jnp.sum(_normal_logpdf(w4, mu4, sig4))
                        + jnp.sum(_normal_logpdf(b4, mu_b4, sig_b4)), atol=1.0, rtol=1e-3)
    assert jnp.allclose(logp4, jnp.sum(_normal_logpdf(w4, 0.0, jnp.float32(1.0)))
                        + jnp.sum(_normal_logpdf(b4, 0.0, jnp.float32(1.0))), atol=1.0, rtol=1e-3)

    # ragged prior path (zero-padding is exact for a plain linear)
    w5 = jax.random.normal(kr[0], (DIM_OUT4, DIM_IN4), jnp.float32)
    b5 = jax.random.normal(kr[1], (DIM_OUT4,), jnp.float32)
    y5 = jax.block_until_ready(pallas_linear(x4, w5, b5, tn_target=128, tk_target=128))
    assert jnp.allclose(y5, x4 @ w5.T + b5, atol=5e-2, rtol=5e-3)

    print("KERNEL_OK")
</pallas_src>

<mosaic_0001>
module attributes {stable_mosaic.version = 11 : i64} {
  func.func @fused_bayes_linear_kernel(%arg0: i32, %arg1: i32, %arg2: memref<8x32xf32, #tpu.memory_space<vmem>>, %arg3: memref<16x32xf32, #tpu.memory_space<vmem>>, %arg4: memref<16x32xf32, #tpu.memory_space<vmem>>, %arg5: memref<16x32xf32, #tpu.memory_space<vmem>>, %arg6: memref<1x16xf32, #tpu.memory_space<vmem>>, %arg7: memref<1x16xf32, #tpu.memory_space<vmem>>, %arg8: memref<1x16xf32, #tpu.memory_space<vmem>>, %arg9: memref<8x16xf32, #tpu.memory_space<vmem>>, %arg10: memref<1x8x128xf32, #tpu.memory_space<vmem>>, %arg11: memref<1x8x128xf32, #tpu.memory_space<vmem>>, %arg12: memref<8x16xf32, #tpu.memory_space<vmem>>) attributes {dimension_semantics = [#tpu.dimension_semantics<parallel>, #tpu.dimension_semantics<arbitrary>], iteration_bounds = array<i64: 1, 1>, scalar_prefetch = 0 : i64, scratch_operands = 1 : i64, tpu.core_type = #tpu.core_type<tc>, window_params = [{transform_indices = @transform_0, window_bounds = array<i64: 8, 32>}, {transform_indices = @transform_1, window_bounds = array<i64: 16, 32>}, {transform_indices = @transform_2, window_bounds = array<i64: 16, 32>}, {transform_indices = @transform_3, window_bounds = array<i64: 16, 32>}, {transform_indices = @transform_4, window_bounds = array<i64: 1, 16>}, {transform_indices = @transform_5, window_bounds = array<i64: 1, 16>}, {transform_indices = @transform_6, window_bounds = array<i64: 1, 16>}, {transform_indices = @transform_7, window_bounds = array<i64: 8, 16>}, {transform_indices = @transform_8, window_bounds = array<i64: 1, 8, 128>}, {transform_indices = @transform_9, window_bounds = array<i64: 1, 8, 128>}]} {
    %c0_i32 = arith.constant 0 : i32
    %0 = arith.cmpi eq, %arg1, %c0_i32 : i32
    %1 = arith.extui %0 : i1 to i32
    %c0_i32_0 = arith.constant 0 : i32
    %2 = arith.cmpi ne, %1, %c0_i32_0 : i32
    scf.if %2 {
      %cst_35 = arith.constant 0.000000e+00 : f32
      %53 = vector.broadcast %cst_35 : f32 to vector<8x16xf32>
      %c0_36 = arith.constant 0 : index
      %c0_37 = arith.constant 0 : index
      %54 = vector.load %arg12[%c0_36, %c0_37] : memref<8x16xf32, #tpu.memory_space<vmem>>, vector<8x16xf32>
      tpu.vector_store %arg12[%c0_36, %c0_37], %53 {strides = array<i32>} : memref<8x16xf32, #tpu.memory_space<vmem>>, vector<8x16xf32>,
      %cst_38 = arith.constant 0.000000e+00 : f32
      %55 = vector.broadcast %cst_38 : f32 to vector<1x8x128xf32>
      %c0_39 = arith.constant 0 : index
      %c0_40 = arith.constant 0 : index
      %c0_41 = arith.constant 0 : index
      %56 = vector.load %arg10[%c0_39, %c0_40, %c0_41] : memref<1x8x128xf32, #tpu.memory_space<vmem>>, vector<1x8x128xf32>
      tpu.vector_store %arg10[%c0_39, %c0_40, %c0_41], %55 {strides = array<i32>} : memref<1x8x128xf32, #tpu.memory_space<vmem>>, vector<1x8x128xf32>,
      %cst_42 = arith.constant 0.000000e+00 : f32
      %57 = vector.broadcast %cst_42 : f32 to vector<1x8x128xf32>
      %c0_43 = arith.constant 0 : index
      %c0_44 = arith.constant 0 : index
      %c0_45 = arith.constant 0 : index
      %58 = vector.load %arg11[%c0_43, %c0_44, %c0_45] : memref<1x8x128xf32, #tpu.memory_space<vmem>>, vector<1x8x128xf32>
      tpu.vector_store %arg11[%c0_43, %c0_44, %c0_45], %57 {strides = array<i32>} : memref<1x8x128xf32, #tpu.memory_space<vmem>>, vector<1x8x128xf32>,
    } else {
    }
    %c0 = arith.constant 0 : index
    %c0_1 = arith.constant 0 : index
    %3 = vector.load %arg3[%c0, %c0_1] : memref<16x32xf32, #tpu.memory_space<vmem>>, vector<16x32xf32>
    %c0_2 = arith.constant 0 : index
    %c0_3 = arith.constant 0 : index
    %4 = vector.load %arg4[%c0_2, %c0_3] : memref<16x32xf32, #tpu.memory_space<vmem>>, vector<16x32xf32>
    %c0_4 = arith.constant 0 : index
    %c0_5 = arith.constant 0 : index
    %5 = vector.load %arg5[%c0_4, %c0_5] : memref<16x32xf32, #tpu.memory_space<vmem>>, vector<16x32xf32>
    %cst = arith.constant 0.000000e+00 : f32
    %6 = vector.broadcast %cst : f32 to vector<16x32xf32>
    %7 = arith.maximumf %4, %6 : vector<16x32xf32>
    %8 = math.absf %4 : vector<16x32xf32>
    %cst_6 = arith.constant 0.000000e+00 : f32
    %9 = vector.broadcast %cst_6 : f32 to vector<16x32xf32>
    %10 = arith.subf %9, %8 : vector<16x32xf32>
    %11 = math.exp %10 : vector<16x32xf32>
    %12 = math.log1p %11 : vector<16x32xf32>
    %13 = arith.addf %7, %12 : vector<16x32xf32>
    %14 = arith.mulf %13, %5 : vector<16x32xf32>
    %15 = arith.addf %3, %14 : vector<16x32xf32>
    %16 = arith.mulf %5, %5 : vector<16x32xf32>
    %cst_7 = arith.constant -5.000000e-01 : f32
    %17 = vector.broadcast %cst_7 : f32 to vector<16x32xf32>
    %18 = arith.mulf %17, %16 : vector<16x32xf32>
    %19 = math.log %13 : vector<16x32xf32>
    %20 = arith.subf %18, %19 : vector<16x32xf32>
    %21 = vector.shape_cast %20 : vector<16x32xf32> to vector<1x16x32xf32>
    %cst_8 = arith.constant dense<0.000000e+00> : vector<1xf32>
    %22 = vector.multi_reduction <add>, %21, %cst_8 [1, 2] : vector<1x16x32xf32> to vector<1xf32>
    %23 = vector.shape_cast %22 : vector<1xf32> to vector<1x1x1xf32>
    %24 = vector.extract %23[0, 0, 0] : f32 from vector<1x1x1xf32>
    %cst_9 = arith.constant 470.496521 : f32
    %25 = arith.subf %24, %cst_9 : f32
    %cst_10 = arith.constant 1.000000e+00 : f32
    %26 = vector.broadcast %cst_10 : f32 to vector<16x32xf32>
    %27 = arith.mulf %15, %26 : vector<16x32xf32>
    %cst_11 = arith.constant -5.000000e-01 : f32
    %28 = vector.broadcast %cst_11 : f32 to vector<16x32xf32>
    %29 = arith.mulf %28, %27 : vector<16x32xf32>
    %30 = arith.mulf %29, %27 : vector<16x32xf32>
    %cst_12 = arith.constant -0.918938517 : f32
    %31 = vector.broadcast %cst_12 : f32 to vector<16x32xf32>
    %32 = arith.addf %30, %31 : vector<16x32xf32>
    %33 = vector.shape_cast %32 : vector<16x32xf32> to vector<1x16x32xf32>
    %cst_13 = arith.constant dense<0.000000e+00> : vector<1xf32>
    %34 = vector.multi_reduction <add>, %33, %cst_13 [1, 2] : vector<1x16x32xf32> to vector<1xf32>
    %35 = vector.shape_cast %34 : vector<1xf32> to vector<1x1x1xf32>
    %36 = vector.extract %35[0, 0, 0] : f32 from vector<1x1x1xf32>
    %c0_14 = arith.constant 0 : index
    %c0_15 = arith.constant 0 : index
    %c0_16 = arith.constant 0 : index
    %37 = vector.load %arg10[%c0_14, %c0_15, %c0_16] : memref<1x8x128xf32, #tpu.memory_space<vmem>>, vector<1x8x128xf32>
    %38 = vector.broadcast %25 : f32 to vector<1x8x128xf32>
    %39 = arith.addf %37, %38 : vector<1x8x128xf32>
    %c0_17 = arith.constant 0 : index
    %c0_18 = arith.constant 0 : index
    %c0_19 = arith.constant 0 : index
    %40 = vector.load %arg10[%c0_17, %c0_18, %c0_19] : memref<1x8x128xf32, #tpu.memory_space<vmem>>, vector<1x8x128xf32>
    tpu.vector_store %arg10[%c0_17, %c0_18, %c0_19], %39 {strides = array<i32>} : memref<1x8x128xf32, #tpu.memory_space<vmem>>, vector<1x8x128xf32>,
    %c0_20 = arith.constant 0 : index
    %c0_21 = arith.constant 0 : index
    %c0_22 = arith.constant 0 : index
    %41 = vector.load %arg11[%c0_20, %c0_21, %c0_22] : memref<1x8x128xf32, #tpu.memory_space<vmem>>, vector<1x8x128xf32>
    %42 = vector.broadcast %36 : f32 to vector<1x8x128xf32>
    %43 = arith.addf %41, %42 : vector<1x8x128xf32>
    %c0_23 = arith.constant 0 : index
    %c0_24 = arith.constant 0 : index
    %c0_25 = arith.constant 0 : index
    %44 = vector.load %arg11[%c0_23, %c0_24, %c0_25] : memref<1x8x128xf32, #tpu.memory_space<vmem>>, vector<1x8x128xf32>
    tpu.vector_store %arg11[%c0_23, %c0_24, %c0_25], %43 {strides = array<i32>} : memref<1x8x128xf32, #tpu.memory_space<vmem>>, vector<1x8x128xf32>,
    %c0_26 = arith.constant 0 : index
    %c0_27 = arith.constant 0 : index
    %45 = vector.load %arg12[%c0_26, %c0_27] : memref<8x16xf32, #tpu.memory_space<vmem>>, vector<8x16xf32>
    %c0_28 = arith.constant 0 : index
    %c0_29 = arith.constant 0 : index
    %46 = vector.load %arg2[%c0_28, %c0_29] : memref<8x32xf32, #tpu.memory_space<vmem>>, vector<8x32xf32>
    %cst_30 = arith.constant dense<0.000000e+00> : vector<8x16xf32>
    %47 = tpu.matmul %46, %15, %cst_30 {dimension_numbers = #tpu.dot_dimension_numbers<[1], [1], [0], [0], [0, 0, 1, 0], [], []>} : vector<8x32xf32>, vector<16x32xf32>, vector<8x16xf32> -> vector<8x16xf32>
    %48 = arith.addf %45, %47 : vector<8x16xf32>
    %c0_31 = arith.constant 0 : index
    %c0_32 = arith.constant 0 : index
    %49 = vector.load %arg12[%c0_31, %c0_32] : memref<8x16xf32, #tpu.memory_space<vmem>>, vector<8x16xf32>
    tpu.vector_store %arg12[%c0_31, %c0_32], %48 {strides = array<i32>} : memref<8x16xf32, #tpu.memory_space<vmem>>, vector<8x16xf32>,
    %c0_i32_33 = arith.constant 0 : i32
    %50 = arith.cmpi eq, %arg1, %c0_i32_33 : i32
    %51 = arith.extui %50 : i1 to i32
    %c0_i32_34 = arith.constant 0 : i32
    %52 = arith.cmpi ne, %51, %c0_i32_34 : i32
    scf.if %52 {
      %c0_35 = arith.constant 0 : index
      %c0_36 = arith.constant 0 : index
      %53 = vector.load %arg6[%c0_35, %c0_36] : memref<1x16xf32, #tpu.memory_space<vmem>>, vector<1x16xf32>
      %c0_37 = arith.constant 0 : index
      %c0_38 = arith.constant 0 : index
      %54 = vector.load %arg7[%c0_37, %c0_38] : memref<1x16xf32, #tpu.memory_space<vmem>>, vector<1x16xf32>
      %c0_39 = arith.constant 0 : index
      %c0_40 = arith.constant 0 : index
      %55 = vector.load %arg8[%c0_39, %c0_40] : memref<1x16xf32, #tpu.memory_space<vmem>>, vector<1x16xf32>
      %cst_41 = arith.constant 0.000000e+00 : f32
      %56 = vector.broadcast %cst_41 : f32 to vector<1x16xf32>
      %57 = arith.maximumf %54, %56 : vector<1x16xf32>
      %58 = math.absf %54 : vector<1x16xf32>
      %cst_42 = arith.constant 0.000000e+00 : f32
      %59 = vector.broadcast %cst_42 : f32 to vector<1x16xf32>
      %60 = arith.subf %59, %58 : vector<1x16xf32>
      %61 = math.exp %60 : vector<1x16xf32>
      %62 = math.log1p %61 : vector<1x16xf32>
      %63 = arith.addf %57, %62 : vector<1x16xf32>
      %64 = arith.mulf %63, %55 : vector<1x16xf32>
      %65 = arith.addf %53, %64 : vector<1x16xf32>
      %c0_43 = arith.constant 0 : index
      %c0_44 = arith.constant 0 : index
      %66 = vector.load %arg12[%c0_43, %c0_44] : memref<8x16xf32, #tpu.memory_space<vmem>>, vector<8x16xf32>
      %67 = vector.broadcast %65 : vector<1x16xf32> to vector<8x16xf32>
      %68 = arith.addf %66, %67 : vector<8x16xf32>
      %c0_45 = arith.constant 0 : index
      %c0_46 = arith.constant 0 : index
      %69 = vector.load %arg9[%c0_45, %c0_46] : memref<8x16xf32, #tpu.memory_space<vmem>>, vector<8x16xf32>
      tpu.vector_store %arg9[%c0_45, %c0_46], %68 {strides = array<i32>} : memref<8x16xf32, #tpu.memory_space<vmem>>, vector<8x16xf32>,
      %c0_47 = arith.constant 0 : index
      %c0_48 = arith.constant 0 : index
      %c0_49 = arith.constant 0 : index
      %70 = vector.load %arg10[%c0_47, %c0_48, %c0_49] : memref<1x8x128xf32, #tpu.memory_space<vmem>>, vector<1x8x128xf32>
      %71 = arith.mulf %55, %55 : vector<1x16xf32>
      %cst_50 = arith.constant -5.000000e-01 : f32
      %72 = vector.broadcast %cst_50 : f32 to vector<1x16xf32>
      %73 = arith.mulf %72, %71 : vector<1x16xf32>
      %74 = math.log %63 : vector<1x16xf32>
      %75 = arith.subf %73, %74 : vector<1x16xf32>
      %76 = vector.shape_cast %75 : vector<1x16xf32> to vector<1x1x16xf32>
      %cst_51 = arith.constant dense<0.000000e+00> : vector<1xf32>
      %77 = vector.multi_reduction <add>, %76, %cst_51 [1, 2] : vector<1x1x16xf32> to vector<1xf32>
      %78 = vector.shape_cast %77 : vector<1xf32> to vector<1x1x1xf32>
      %79 = vector.extract %78[0, 0, 0] : f32 from vector<1x1x1xf32>
      %cst_52 = arith.constant 14.7030163 : f32
      %80 = arith.subf %79, %cst_52 : f32
      %81 = vector.broadcast %80 : f32 to vector<1x8x128xf32>
      %82 = arith.addf %70, %81 : vector<1x8x128xf32>
      %c0_53 = arith.constant 0 : index
      %c0_54 = arith.constant 0 : index
      %c0_55 = arith.constant 0 : index
      %83 = vector.load %arg10[%c0_53, %c0_54, %c0_55] : memref<1x8x128xf32, #tpu.memory_space<vmem>>, vector<1x8x128xf32>
      tpu.vector_store %arg10[%c0_53, %c0_54, %c0_55], %82 {strides = array<i32>} : memref<1x8x128xf32, #tpu.memory_space<vmem>>, vector<1x8x128xf32>,
      %c0_56 = arith.constant 0 : index
      %c0_57 = arith.constant 0 : index
      %c0_58 = arith.constant 0 : index
      %84 = vector.load %arg11[%c0_56, %c0_57, %c0_58] : memref<1x8x128xf32, #tpu.memory_space<vmem>>, vector<1x8x128xf32>
      %cst_59 = arith.constant 1.000000e+00 : f32
      %85 = vector.broadcast %cst_59 : f32 to vector<1x16xf32>
      %86 = arith.mulf %65, %85 : vector<1x16xf32>
      %cst_60 = arith.constant -5.000000e-01 : f32
      %87 = vector.broadcast %cst_60 : f32 to vector<1x16xf32>
      %88 = arith.mulf %87, %86 : vector<1x16xf32>
      %89 = arith.mulf %88, %86 : vector<1x16xf32>
      %cst_61 = arith.constant -0.918938517 : f32
      %90 = vector.broadcast %cst_61 : f32 to vector<1x16xf32>
      %91 = arith.addf %89, %90 : vector<1x16xf32>
      %92 = vector.shape_cast %91 : vector<1x16xf32> to vector<1x1x16xf32>
      %cst_62 = arith.constant dense<0.000000e+00> : vector<1xf32>
      %93 = vector.multi_reduction <add>, %92, %cst_62 [1, 2] : vector<1x1x16xf32> to vector<1xf32>
      %94 = vector.shape_cast %93 : vector<1xf32> to vector<1x1x1xf32>
      %95 = vector.extract %94[0, 0, 0] : f32 from vector<1x1x1xf32>
      %96 = vector.broadcast %95 : f32 to vector<1x8x128xf32>
      %97 = arith.addf %84, %96 : vector<1x8x128xf32>
      %c0_63 = arith.constant 0 : index
      %c0_64 = arith.constant 0 : index
      %c0_65 = arith.constant 0 : index
      %98 = vector.load %arg11[%c0_63, %c0_64, %c0_65] : memref<1x8x128xf32, #tpu.memory_space<vmem>>, vector<1x8x128xf32>
      tpu.vector_store %arg11[%c0_63, %c0_64, %c0_65], %97 {strides = array<i32>} : memref<1x8x128xf32, #tpu.memory_space<vmem>>, vector<1x8x128xf32>,
    } else {
    }
    return
  }
  func.func @transform_0(%arg0: i32, %arg1: i32) -> (i32, i32) {
    %c0_i32 = arith.constant 0 : i32
    %c0_i32_0 = arith.constant 0 : i32
    return %c0_i32, %arg1 : i32, i32
  }
  func.func @transform_1(%arg0: i32, %arg1: i32) -> (i32, i32) {
    %c0_i32 = arith.constant 0 : i32
    return %arg0, %arg1 : i32, i32
  }
  func.func @transform_2(%arg0: i32, %arg1: i32) -> (i32, i32) {
    %c0_i32 = arith.constant 0 : i32
    return %arg0, %arg1 : i32, i32
  }
  func.func @transform_3(%arg0: i32, %arg1: i32) -> (i32, i32) {
    %c0_i32 = arith.constant 0 : i32
    return %arg0, %arg1 : i32, i32
  }
  func.func @transform_4(%arg0: i32, %arg1: i32) -> (i32, i32) {
    %c0_i32 = arith.constant 0 : i32
    %c0_i32_0 = arith.constant 0 : i32
    return %c0_i32, %arg0 : i32, i32
  }
  func.func @transform_5(%arg0: i32, %arg1: i32) -> (i32, i32) {
    %c0_i32 = arith.constant 0 : i32
    %c0_i32_0 = arith.constant 0 : i32
    return %c0_i32, %arg0 : i32, i32
  }
  func.func @transform_6(%arg0: i32, %arg1: i32) -> (i32, i32) {
    %c0_i32 = arith.constant 0 : i32
    %c0_i32_0 = arith.constant 0 : i32
    return %c0_i32, %arg0 : i32, i32
  }
  func.func @transform_7(%arg0: i32, %arg1: i32) -> (i32, i32) {
    %c0_i32 = arith.constant 0 : i32
    %c0_i32_0 = arith.constant 0 : i32
    return %c0_i32, %arg0 : i32, i32
  }
  func.func @transform_8(%arg0: i32, %arg1: i32) -> (i32, i32, i32) {
    %c0_i32 = arith.constant 0 : i32
    %c0_i32_0 = arith.constant 0 : i32
    %c0_i32_1 = arith.constant 0 : i32
    return %arg0, %c0_i32, %c0_i32_0 : i32, i32, i32
  }
  func.func @transform_9(%arg0: i32, %arg1: i32) -> (i32, i32, i32) {
    %c0_i32 = arith.constant 0 : i32
    %c0_i32_0 = arith.constant 0 : i32
    %c0_i32_1 = arith.constant 0 : i32
    return %arg0, %c0_i32, %c0_i32_0 : i32, i32, i32
  }
}

</mosaic_0001>

<llo_original>
// kernel: tpu_custom_call.1
$region0: #{tpu_custom_call.1}
  #allocation0 [shape = 'u32[]', space=smem, size = 0x4, offset = 0x4, fixed_abs, tag = 'smem constant byte address 0x4 - core index']
  #allocation1 [shape = 'u32[144,128]{1,0:T(1,128)}', space=vmem, size = 0x12000, scoped, tag = 'internal scratch']
  #allocation2 [shape = 'f32[8,16]{1,0:T(8,128)}', space=vmem, size = 0x1000, scoped, tag = 'scratch operand']
  %s0 = inlined_call_operand.hbm [shape: f32[8,32], index: 0, kind: input, shape index: {}]
  %s1 = inlined_call_operand.hbm [shape: f32[16,32], index: 1, kind: input, shape index: {}]
  %s2 = inlined_call_operand.hbm [shape: f32[16,32], index: 2, kind: input, shape index: {}]
  %s3 = inlined_call_operand.hbm [shape: f32[16,32], index: 3, kind: input, shape index: {}]
  %s4 = inlined_call_operand.vmem [shape: f32[1,16], index: 4, kind: input, shape index: {}]
  %s5 = inlined_call_operand.vmem [shape: f32[1,16], index: 5, kind: input, shape index: {}]
  %s6 = inlined_call_operand.vmem [shape: f32[1,16], index: 6, kind: input, shape index: {}]
  %s7 = inlined_call_operand.hbm [shape: f32[8,16], index: 7, kind: output, shape index: {0}]
  %s8 = inlined_call_operand.hbm [shape: f32[1,8,128], index: 8, kind: output, shape index: {1}]
  %s9 = inlined_call_operand.hbm [shape: f32[1,8,128], index: 9, kind: output, shape index: {2}]
  %10 = xla_tuple %s7, %s8, %s9
  %s11 = sld [smem:[#allocation0]]
  $region78: #{tpu_custom_call.1} parent=0
    _
  %s13 = ssub.s32 1, %s11
  %s14 = scalar_select 0, %s13, %s11
  $region1: #{tpu_custom_call.1} parent=0
    #allocation3 [shape = 'u8[4096]{0}', space=vmem, size = 0x1000, scoped, tag = 'input window, operand 0, single buffered']
    #allocation4 [shape = 's32[1]{0}', space=sflag, size = 0x4, scoped, tag = 'scoped memory for tpu_custom_call.1']
    #allocation5 [shape = 's32[1]{0}', space=sflag, size = 0x4, scoped, tag = 'scoped memory for tpu_custom_call.1']
    #allocation6 [shape = 'u8[8192]{0}', space=vmem, size = 0x2000, scoped, tag = 'input window, operand 1, single buffered']
    #allocation7 [shape = 's32[1]{0}', space=sflag, size = 0x4, scoped, tag = 'scoped memory for tpu_custom_call.1']
    #allocation8 [shape = 'u8[8192]{0}', space=vmem, size = 0x2000, scoped, tag = 'input window, operand 2, single buffered']
    #allocation9 [shape = 'u8[8192]{0}', space=vmem, size = 0x2000, scoped, tag = 'input window, operand 3, single buffered']
    #allocation10 [shape = 's32[1]{0}', space=sflag, size = 0x4, scoped, tag = 'scoped memory for tpu_custom_call.1']
    #allocation11 [shape = 'u8[4096]{0}', space=vmem, size = 0x1000, scoped, tag = 'output window, operand 0, single buffered']
    #allocation12 [shape = 'u8[4096]{0}', space=vmem, size = 0x1000, scoped, tag = 'output window, operand 1, single buffered']
    #allocation13 [shape = 's32[1]{0}', space=sflag, size = 0x4, scoped, tag = 'scoped memory for tpu_custom_call.1']
    #allocation14 [shape = 'u8[4096]{0}', space=vmem, size = 0x1000, scoped, tag = 'output window, operand 2, single buffered']
    %15 = vsyncpa [#allocation4], 0
    %16 = vsyncpa [#allocation7], 0
    %17 = vsyncpa [#allocation10], 0
    %18 = vsyncpa [#allocation5], 0
    %19 = vsyncpa [#allocation13], 0
    // Predicated region
    $region2: #{tpu_custom_call.1} parent=1 // pred_check
      _
    $region3: #{tpu_custom_call.1} parent=1 // pred_check_branch
      %21 = sbr.rel (0) target = $region5
    $region4: #{tpu_custom_call.1} parent=1 // pred_region
      %s23 = ssub.s32 128, 128
      %24 = vsyncadd [#allocation4], %s23
      %s26 = sshll.u32 [#allocation3], 4
      %s27 = int_to_ptr.vmem [resolvable:$true] %s26
      %29 = dma.hbm_to_vmem [thread:$0]  %s0, 128, %s27, [#allocation4]
    $region5: #{tpu_custom_call.1} parent=1 // pred_fallthru
      _
    // Predicated region
    $region6: #{tpu_custom_call.1} parent=1 // pred_check
      _
    $region7: #{tpu_custom_call.1} parent=1 // pred_check_branch
      %31 = sbr.rel (0) target = $region9
    $region8: #{tpu_custom_call.1} parent=1 // pred_region
      %s33 = ssub.s32 256, 256
      %34 = vsyncadd [#allocation7], %s33
      %s35 = sshll.u32 [#allocation6], 4
      %s36 = int_to_ptr.vmem [resolvable:$true] %s35
      %41 = dma.hbm_to_vmem [thread:$0]  %s1, 256, %s36, [#allocation7], 128, 128, 8
    $region9: #{tpu_custom_call.1} parent=1 // pred_fallthru
      _
    // Predicated region
    $region10: #{tpu_custom_call.1} parent=1 // pred_check
      _
    $region11: #{tpu_custom_call.1} parent=1 // pred_check_branch
      %43 = sbr.rel (0) target = $region13
    $region12: #{tpu_custom_call.1} parent=1 // pred_region
      %s45 = ssub.s32 256, 256
      %46 = vsyncadd [#allocation7], %s45
      %s47 = sshll.u32 [#allocation8], 4
      %s48 = int_to_ptr.vmem [resolvable:$true] %s47
      %53 = dma.hbm_to_vmem [thread:$0]  %s2, 256, %s48, [#allocation7], 128, 128, 8
    $region13: #{tpu_custom_call.1} parent=1 // pred_fallthru
      _
    // Predicated region
    $region14: #{tpu_custom_call.1} parent=1 // pred_check
      _
    $region15: #{tpu_custom_call.1} parent=1 // pred_check_branch
      %55 = sbr.rel (0) target = $region17
    $region16: #{tpu_custom_call.1} parent=1 // pred_region
      %s57 = ssub.s32 256, 256
      %58 = vsyncadd [#allocation10], %s57
      %s59 = sshll.u32 [#allocation9], 4
      %s60 = int_to_ptr.vmem [resolvable:$true] %s59
      %65 = dma.hbm_to_vmem [thread:$0]  %s3, 256, %s60, [#allocation10], 128, 128, 8
    $region17: #{tpu_custom_call.1} parent=1 // pred_fallthru
      _
    // Predicated region
    $region18: #{tpu_custom_call.1} parent=1 // pred_check
      _
    $region19: #{tpu_custom_call.1} parent=1 // pred_check_branch
      %67 = sbr.rel (0) target = $region21
    $region20: #{tpu_custom_call.1} parent=1 // pred_region
      _
    $region21: #{tpu_custom_call.1} parent=1 // pred_fallthru
      _
    // Predicated region
    $region22: #{tpu_custom_call.1} parent=1 // pred_check
      _
    $region23: #{tpu_custom_call.1} parent=1 // pred_check_branch
      %69 = sbr.rel (0) target = $region25
    $region24: #{tpu_custom_call.1} parent=1 // pred_region
      _
    $region25: #{tpu_custom_call.1} parent=1 // pred_fallthru
      _
    // Predicated region
    $region26: #{tpu_custom_call.1} parent=1 // pred_check
      _
    $region27: #{tpu_custom_call.1} parent=1 // pred_check_branch
      %71 = sbr.rel (0) target = $region29
    $region28: #{tpu_custom_call.1} parent=1 // pred_region
      _
    $region29: #{tpu_custom_call.1} parent=1 // pred_fallthru
      _
    // Predicated region
    $region30: #{tpu_custom_call.1} parent=1 // pred_check
      _
    $region31: #{tpu_custom_call.1} parent=1 // pred_check_branch
      %73 = sbr.rel (0) target = $region33
    $region32: #{tpu_custom_call.1} parent=1 // pred_region
      %74 = dma.done [#allocation4], 128
    $region33: #{tpu_custom_call.1} parent=1 // pred_fallthru
      _
    // Predicated region
    $region34: #{tpu_custom_call.1} parent=1 // pred_check
      _
    $region35: #{tpu_custom_call.1} parent=1 // pred_check_branch
      %76 = sbr.rel (0) target = $region37
    $region36: #{tpu_custom_call.1} parent=1 // pred_region
      %77 = dma.done [#allocation7], 256
    $region37: #{tpu_custom_call.1} parent=1 // pred_fallthru
      _
    // Predicated region
    $region38: #{tpu_custom_call.1} parent=1 // pred_check
      _
    $region39: #{tpu_custom_call.1} parent=1 // pred_check_branch
      %79 = sbr.rel (0) target = $region41
    $region40: #{tpu_custom_call.1} parent=1 // pred_region
      %80 = dma.done [#allocation7], 256
    $region41: #{tpu_custom_call.1} parent=1 // pred_fallthru
      _
    // Predicated region
    $region42: #{tpu_custom_call.1} parent=1 // pred_check
      _
    $region43: #{tpu_custom_call.1} parent=1 // pred_check_branch
      %82 = sbr.rel (0) target = $region45
    $region44: #{tpu_custom_call.1} parent=1 // pred_region
      %83 = dma.done [#allocation10], 256
    $region45: #{tpu_custom_call.1} parent=1 // pred_fallthru
      _
    %p84 = scmp.eq.s32.totalorder 0, 0
    // Predicated region
    $region46: #{tpu_custom_call.1} parent=1 // pred_check
      %p85 = pneg %p84
    $region47: #{tpu_custom_call.1} parent=1 // pred_check_branch
      %87 = sbr.rel (%p85) target = $region49
    $region48: #{tpu_custom_call.1} parent=1 // pred_region
      %vm88 = vcmask 130048
      %89 = vst.msk [vmem:[#allocation2] sm:$0xff] %vm88, 0.0
      %90 = vst [vmem:[#allocation12] sm:$0xff] 0.0
      %91 = vst [vmem:[#allocation14] sm:$0xff] 0.0
    $region49: #{tpu_custom_call.1} parent=1 // pred_fallthru
      _
    %v92 = vld [vmem:[#allocation6] sm:$0xff]
    %v93 = vld [vmem:[#allocation6 + $0x8] sm:$0xff]
    %v94 = vld [vmem:[#allocation8] sm:$0xff]
    %v95 = vld [vmem:[#allocation8 + $0x8] sm:$0xff]
    %v96 = vld [vmem:[#allocation9] sm:$0xff]
    %v97 = vld [vmem:[#allocation9 + $0x8] sm:$0xff]
    %v98 = vmax.f32 %v94, 0.0
    %v99 = vmax.f32 %v95, 0.0
    %v100 = vand.u32 2147483647, %v94
    %v101 = vand.u32 2147483647, %v95
    %v102 = vsub.f32 0.0, %v100
    %v103 = vsub.f32 0.0, %v101
    %v104 = vmul.f32 %v102, 1.442695
    %v105 = vpow.pop %v104
    %v106 = vmul.f32 %v103, 1.442695
    %v107 = vpow.pop %v106
    %v108 = vadd.f32 %v105, 1.0
    %v109 = vlog2.pop %v108
    %v110 = vmul.f32 %v109, 0.6931472
    %v111 = vmul.f32 -0.5, %v105
    %v112 = vadd.f32 %v111, 1.0
    %v113 = vmul.f32 %v112, %v105
    %v114 = vand.u32 2147483647, %v105
    %vm115 = vcmp.lt.f32.partialorder %v114, 0.0004427343
    %v116 = vsel %vm115, %v113, %v110
    %v117 = vadd.f32 %v107, 1.0
    %v118 = vlog2.pop %v117
    %v119 = vmul.f32 %v118, 0.6931472
    %v120 = vmul.f32 -0.5, %v107
    %v121 = vadd.f32 %v120, 1.0
    %v122 = vmul.f32 %v121, %v107
    %v123 = vand.u32 2147483647, %v107
    %vm124 = vcmp.lt.f32.partialorder %v123, 0.0004427343
    %v125 = vsel %vm124, %v122, %v119
    %v126 = vadd.f32 %v98, %v116
    %v127 = vadd.f32 %v99, %v125
    %v128 = vmul.f32 %v126, %v96
    %v129 = vmul.f32 %v127, %v97
    %v130 = vadd.f32 %v92, %v128
    %v131 = vadd.f32 %v93, %v129
    %v132 = vmul.f32 %v96, %v96
    %v133 = vmul.f32 %v97, %v97
    %v134 = vmul.f32 %v132, -0.5
    %v135 = vmul.f32 %v133, -0.5
    %v136 = vlog2.pop %v126
    %v137 = vmul.f32 %v136, 0.6931472
    %v138 = vlog2.pop %v127
    %v139 = vmul.f32 %v138, 0.6931472
    %v140 = vsub.f32 %v134, %v137
    %v141 = vsub.f32 %v135, %v139
    %vm142 = vcmask 261120
    %v143 = vsel %vm142, %v140, 0.0
    %v144 = vsel %vm142, %v141, 0.0
    %v145 = vadd.f32 %v143, %v144
    %146 = vadd.xlane.f32.xlu0 %v145
    %v147 = vpop.xlane.xlu0 %146
    %v148 = vrot.slane %v147, 4
    %v149 = vadd.f32 %v147, %v148
    %v150 = vrot.slane %v149, 2
    %v151 = vadd.f32 %v149, %v150
    %v152 = vrot.slane %v151, 1
    %v153 = vadd.f32 %v151, %v152
    %s154 = vtos %v153
    %s155 = ssub.f32 %s154, 470.49652
    %v156 = vmul.f32 %v130, -0.5
    %v157 = vmul.f32 %v131, -0.5
    %v158 = vmul.f32 %v156, %v130
    %v159 = vmul.f32 %v157, %v131
    %v160 = vadd.f32 %v158, -0.9189385
    %v161 = vadd.f32 %v159, -0.9189385
    %v162 = vsel %vm142, %v160, 0.0
    %v163 = vsel %vm142, %v161, 0.0
    %v164 = vadd.f32 %v162, %v163
    %165 = vadd.xlane.f32.xlu0 %v164
    %v166 = vpop.xlane.xlu0 %165
    %v167 = vrot.slane %v166, 4
    %v168 = vadd.f32 %v166, %v167
    %v169 = vrot.slane %v168, 2
    %v170 = vadd.f32 %v168, %v169
    %v171 = vrot.slane %v170, 1
    %v172 = vadd.f32 %v170, %v171
    %s173 = vtos %v172
    %v174 = vld [vmem:[#allocation12] sm:$0xff]
    %v175 = vstv %s155
    %v176 = vadd.f32 %v174, %v175
    %177 = vst [vmem:[#allocation12] sm:$0xff] %v176
    %v178 = vld [vmem:[#allocation14] sm:$0xff]
    %v179 = vstv %s173
    %v180 = vadd.f32 %v178, %v179
    %181 = vst [vmem:[#allocation14] sm:$0xff] %v180
    %v182 = vld [vmem:[#allocation2] sm:$0xff]
    %v183 = vld [vmem:[#allocation3] sm:$0xff]
    %v185 = vsel %vm142, %v183, 0
    %v188 = vsel %vm142, %v130, 0
    %v191 = vsel %vm142, %v131, 0
    %193 = vmatprep.subr.mxu0 0.0
    %194 = vmatpush1.xpose.msra.mxu0 %v188
    %195 = vmatprep.subr.mxu0 0.0
    %196 = vmatpush1.xpose.msra.mxu0 %v191
    %197 = vmatprep.subr.mxu0 0.0
    %198 = vmatpush1.xpose.msra.mxu0 0.0
    %199 = vmatprep.subr.mxu0 0.0
    %200 = vmatpush1.xpose.msra.mxu0 0.0
    %201 = vmatprep.subr.mxu0 0.0
    %202 = vmatpush1.xpose.msra.mxu0 0.0
    %203 = vmatprep.subr.mxu0 0.0
    %204 = vmatpush1.xpose.msra.mxu0 0.0
    %205 = vmatprep.subr.mxu0 0.0
    %206 = vmatpush1.xpose.msra.mxu0 0.0
    %207 = vmatprep.subr.mxu0 0.0
    %208 = vmatpush1.xpose.msra.mxu0 0.0
    %209 = vmatprep.subr.mxu0 0.0
    %210 = vmatpush1.xpose.msra.mxu0 0.0
    %211 = vmatprep.subr.mxu0 0.0
    %212 = vmatpush1.xpose.msra.mxu0 0.0
    %213 = vmatprep.subr.mxu0 0.0
    %214 = vmatpush1.xpose.msra.mxu0 0.0
    %215 = vmatprep.subr.mxu0 0.0
    %216 = vmatpush1.xpose.msra.mxu0 0.0
    %217 = vmatprep.subr.mxu0 0.0
    %218 = vmatpush1.xpose.msra.mxu0 0.0
    %219 = vmatprep.subr.mxu0 0.0
    %220 = vmatpush1.xpose.msra.mxu0 0.0
    %221 = vmatprep.subr.mxu0 0.0
    %222 = vmatpush1.xpose.msra.mxu0 0.0
    %223 = vmatprep.subr.mxu0 0.0
    %224 = vmatpush1.xpose.msra.mxu0 0.0
    %225 = vmatprep.subr.mxu0 0.0
    %226 = vmatpush1.xpose.msra.mxu0 0.0
    %227 = vmatprep.subr.mxu0 0.0
    %228 = vmatpush1.xpose.msra.mxu0 0.0
    %229 = vmatprep.subr.mxu0 0.0
    %230 = vmatpush1.xpose.msra.mxu0 0.0
    %231 = vmatprep.subr.mxu0 0.0
    %232 = vmatpush1.xpose.msra.mxu0 0.0
    %233 = vmatprep.subr.mxu0 0.0
    %234 = vmatpush1.xpose.msra.mxu0 0.0
    %235 = vmatprep.subr.mxu0 0.0
    %236 = vmatpush1.xpose.msra.mxu0 0.0
    %237 = vmatprep.subr.mxu0 0.0
    %238 = vmatpush1.xpose.msra.mxu0 0.0
    %239 = vmatprep.subr.mxu0 0.0
    %240 = vmatpush1.xpose.msra.mxu0 0.0
    %241 = vmatprep.subr.mxu0 0.0
    %242 = vmatpush1.xpose.msra.mxu0 0.0
    %243 = vmatprep.subr.mxu0 0.0
    %244 = vmatpush1.xpose.msra.mxu0 0.0
    %245 = vmatprep.subr.mxu0 0.0
    %246 = vmatpush1.xpose.msra.mxu0 0.0
    %247 = vmatprep.subr.mxu0 0.0
    %248 = vmatpush1.xpose.msra.mxu0 0.0
    %249 = vmatprep.subr.mxu0 0.0
    %250 = vmatpush1.xpose.msra.mxu0 0.0
    %251 = vmatprep.subr.mxu0 0.0
    %252 = vmatpush1.xpose.msra.mxu0 0.0
    %253 = vmatprep.subr.mxu0 0.0
    %254 = vmatpush1.xpose.msra.mxu0 0.0
    %255 = vmatprep.subr.mxu0 0.0
    %256 = vmatpush1.xpose.msra.mxu0 0.0
    %257 = vmatprep.mubr.f32.mxu0 0.0
    %258 = vmatmul.mubr.f32.gmra.mrb[0].mxu0 %v185
    %v259 = vpop.f32.mrb[0].mxu0
    %v260 = vadd.f32 0.0, %v259
    %v261 = vpop.f32.mrb[0].mxu0
    %262 = vdwg.mxu0
    %v263 = vadd.f32 %v182, %v260
    %vm264 = vcmask 130048
    %265 = vst.msk [vmem:[#allocation2] sm:$0xff] %vm264, %v263
    // Predicated region
    $region50: #{tpu_custom_call.1} parent=1 // pred_check
      %p266 = pneg %p84
    $region51: #{tpu_custom_call.1} parent=1 // pred_check_branch
      %268 = sbr.rel (%p266) target = $region53
    $region52: #{tpu_custom_call.1} parent=1 // pred_region
      %v269 = vld [vmem:[%s4] sm:$0x1]
      %v270 = vld [vmem:[%s5] sm:$0x1]
      %v271 = vld [vmem:[%s6] sm:$0x1]
      %v272 = vmax.f32 %v270, 0.0
      %v273 = vand.u32 2147483647, %v270
      %v274 = vsub.f32 0.0, %v273
      %v275 = vmul.f32 %v274, 1.442695
      %v276 = vpow.pop %v275
      %v277 = vadd.f32 %v276, 1.0
      %v278 = vlog2.pop %v277
      %v279 = vmul.f32 %v278, 0.6931472
      %v280 = vmul.f32 -0.5, %v276
      %v281 = vadd.f32 %v280, 1.0
      %v282 = vmul.f32 %v281, %v276
      %v283 = vand.u32 2147483647, %v276
      %vm284 = vcmp.lt.f32.partialorder %v283, 0.0004427343
      %v285 = vsel %vm284, %v282, %v279
      %v286 = vadd.f32 %v272, %v285
      %v287 = vmul.f32 %v286, %v271
      %v288 = vadd.f32 %v269, %v287
      %v289 = vld [vmem:[#allocation2] sm:$0xff]
      %v291 = vlaneseq
      %v292 = vshrl.u32 %v291, 7
      %v293 = vsub.s32 0, %v292
      %v294 = vrot.slane %v288, %v293
      %v296 = vadd.f32 %v289, %v294
      %297 = vst.msk [vmem:[#allocation11] sm:$0xff] %vm264, %v296
      %v298 = vld [vmem:[#allocation12] sm:$0xff]
      %v299 = vmul.f32 %v271, %v271
      %v300 = vmul.f32 %v299, -0.5
      %v301 = vlog2.pop %v286
      %v302 = vmul.f32 %v301, 0.6931472
      %v303 = vsub.f32 %v300, %v302
      %vm304 = vcmask 122880
      %v305 = vsel %vm304, %v303, 0.0
      %306 = vadd.xlane.f32.xlu0 %v305
      %v307 = vpop.xlane.xlu0 %306
      %v308 = vrot.slane %v307, 4
      %v309 = vadd.f32 %v307, %v308
      %v310 = vrot.slane %v309, 2
      %v311 = vadd.f32 %v309, %v310
      %v312 = vrot.slane %v311, 1
      %v313 = vadd.f32 %v311, %v312
      %s314 = vtos %v313
      %s315 = ssub.f32 %s314, 14.703016
      %v316 = vstv %s315
      %v317 = vadd.f32 %v298, %v316
      %318 = vst [vmem:[#allocation12] sm:$0xff] %v317
      %v319 = vld [vmem:[#allocation14] sm:$0xff]
      %v320 = vmul.f32 %v288, -0.5
      %v321 = vmul.f32 %v320, %v288
      %v322 = vadd.f32 %v321, -0.9189385
      %v323 = vsel %vm304, %v322, 0.0
      %324 = vadd.xlane.f32.xlu0 %v323
      %v325 = vpop.xlane.xlu0 %324
      %v326 = vrot.slane %v325, 4
      %v327 = vadd.f32 %v325, %v326
      %v328 = vrot.slane %v327, 2
      %v329 = vadd.f32 %v327, %v328
      %v330 = vrot.slane %v329, 1
      %v331 = vadd.f32 %v329, %v330
      %s332 = vtos %v331
      %v333 = vstv %s332
      %v334 = vadd.f32 %v319, %v333
      %335 = vst [vmem:[#allocation14] sm:$0xff] %v334
    $region53: #{tpu_custom_call.1} parent=1 // pred_fallthru
      _
    // Predicated region
    $region54: #{tpu_custom_call.1} parent=1 // pred_check
      _
    $region55: #{tpu_custom_call.1} parent=1 // pred_check_branch
      %337 = sbr.rel (0) target = $region57
    $region56: #{tpu_custom_call.1} parent=1 // pred_region
      %s339 = ssub.s32 128, 128
      %340 = vsyncadd [#allocation5], %s339
      %s342 = sshll.u32 [#allocation11], 4
      %s343 = int_to_ptr.vmem [resolvable:$true] %s342
      %345 = dma.vmem_to_hbm [thread:$0]  %s343, 128, %s7, [#allocation5]
    $region57: #{tpu_custom_call.1} parent=1 // pred_fallthru
      _
    // Predicated region
    $region58: #{tpu_custom_call.1} parent=1 // pred_check
      _
    $region59: #{tpu_custom_call.1} parent=1 // pred_check_branch
      %347 = sbr.rel (0) target = $region61
    $region60: #{tpu_custom_call.1} parent=1 // pred_region
      %s349 = ssub.s32 128, 128
      %350 = vsyncadd [#allocation13], %s349
      %s352 = sshll.u32 [#allocation12], 4
      %s353 = int_to_ptr.vmem [resolvable:$true] %s352
      %355 = dma.vmem_to_hbm [thread:$0]  %s353, 128, %s8, [#allocation13]
    $region61: #{tpu_custom_call.1} parent=1 // pred_fallthru
      _
    // Predicated region
    $region62: #{tpu_custom_call.1} parent=1 // pred_check
      _
    $region63: #{tpu_custom_call.1} parent=1 // pred_check_branch
      %357 = sbr.rel (0) target = $region65
    $region64: #{tpu_custom_call.1} parent=1 // pred_region
      %s359 = ssub.s32 128, 128
      %360 = vsyncadd [#allocation13], %s359
      %s362 = sshll.u32 [#allocation14], 4
      %s363 = int_to_ptr.vmem [resolvable:$true] %s362
      %365 = dma.vmem_to_hbm [thread:$0]  %s363, 128, %s9, [#allocation13]
    $region65: #{tpu_custom_call.1} parent=1 // pred_fallthru
      _
    // Predicated region
    $region66: #{tpu_custom_call.1} parent=1 // pred_check
      _
    $region67: #{tpu_custom_call.1} parent=1 // pred_check_branch
      %367 = sbr.rel (0) target = $region69
    $region68: #{tpu_custom_call.1} parent=1 // pred_region
      %368 = dma.done [#allocation5], 128
    $region69: #{tpu_custom_call.1} parent=1 // pred_fallthru
      _
    // Predicated region
    $region70: #{tpu_custom_call.1} parent=1 // pred_check
      _
    $region71: #{tpu_custom_call.1} parent=1 // pred_check_branch
      %370 = sbr.rel (0) target = $region73
    $region72: #{tpu_custom_call.1} parent=1 // pred_region
      %371 = dma.done [#allocation13], 128
    $region73: #{tpu_custom_call.1} parent=1 // pred_fallthru
      _
    // Predicated region
    $region74: #{tpu_custom_call.1} parent=1 // pred_check
      _
    $region75: #{tpu_custom_call.1} parent=1 // pred_check_branch
      %373 = sbr.rel (0) target = $region77
    $region76: #{tpu_custom_call.1} parent=1 // pred_region
      %374 = dma.done [#allocation13], 128
    $region77: #{tpu_custom_call.1} parent=1 // pred_fallthru
      _
    %375 = vsyncpa [#allocation4], 1
    %376 = vsyncpa [#allocation7], 1
    %377 = vsyncpa [#allocation10], 1
    %378 = vsyncpa [#allocation5], 1
    %379 = vsyncpa [#allocation13], 1

</llo_original>
